<compile_context>
chip_gen: v7x
topology: tpu7x:2x2x1
jax: 0.10.0
libtpu: 0.0.40
codegen_flags: <defaults>
</compile_context>

<pallas_src>
import math

import numpy as np
import jax
import jax.numpy as jnp
from jax.experimental import pallas as pl
from jax.experimental.pallas import tpu as pltpu


def _sn_dropout_kernel(x_ref, coeff_ref, o_ref):
    # Pure streaming multiply: one VPU mul per element, HBM-bound everywhere.
    o_ref[...] = x_ref[...] * coeff_ref[...]


def _min_sublanes(itemsize):
    # Native sublane packing: 8 rows for 32-bit, 16 for 16-bit, 32 for 8-bit.
    return {1: 32, 2: 16}.get(itemsize, 8)


def _pick_block_rows(rows, step, max_block_rows):
    """Largest block_rows (multiple of `step`, divisor of rows, <= cap) in the
    best grid tier: (even grid >= 4) > (grid >= 2) > (single block)."""
    limit = min(rows, max_block_rows)
    cands = [br for br in range(step, limit + 1, step) if rows % br == 0]
    if not cands:
        return None

    def tier(br):
        g = rows // br
        if g >= 4 and g % 2 == 0:
            return 0   # both v7x TCs evenly loaded, steady-state pipeline
        if g >= 2:
            return 1   # some prefetch/writeback overlap
        return 2       # single block

    best = min(tier(br) for br in cands)
    return max(br for br in cands if tier(br) == best)


def _build_coeff(num_rows, lanes, n, neurons, factor, dtype):
    """coeff[r, l] = factor if ((r*lanes + l) % n) not in neurons else 0."""
    flat = np.arange(num_rows * lanes, dtype=np.int64) % n
    keep = ~np.isin(flat, np.asarray(neurons, dtype=np.int64))
    coeff = np.where(keep, factor, 0.0).reshape(num_rows, lanes)
    return jnp.asarray(coeff.astype(np.dtype(dtype)))


def single_neuron_dropout(x, neurons):
    """Pallas implementation of SingleNeuronDropout.forward.

    x:        array with batch as the leading dimension (e.g. NCHW).
    neurons:  static Python list of flat-feature indices to drop (mirrors the
              module's self.neurons set via set_neuron).  Indices are
              validated against [0, N) (negatives are normalized like PyTorch).
    """
    shape = x.shape
    b = shape[0]
    n = x.size // b

    norm = []
    for nu in neurons:
        nu = int(nu)
        if nu < 0:
            nu += n
        if not (0 <= nu < n):
            raise ValueError(f"neuron index {nu} out of range for {n} features")
        norm.append(nu)
    neurons = tuple(norm)

    if not neurons:
        # Nothing dropped and factor == 1.0: exact identity, skip the kernel.
        return x

    # Python-static scaling, exactly as in the module (duplicates count in p).
    p = float(len(neurons)) / float(n)
    factor = 1.0 / (1.0 - p)

    total = x.size
    itemsize = jnp.dtype(x.dtype).itemsize
    min_rows = _min_sublanes(itemsize)

    # ---- lane-dense 2-D view (rows, lanes) ---------------------------------
    lanes = None
    for cand in (4096, 2048, 1024, 512, 256, 128):
        if total % cand == 0 and (total // cand) % min_rows == 0:
            lanes = cand
            break

    if lanes is None:
        # Irregular size: pad the flat tensor up to a tileable slab and slice
        # the result back (avoids masked partial stores / whole-array blocks).
        lanes = 1024 if total >= min_rows * 1024 else 128
        rows = -(-total // lanes)
        rows = -(-rows // min_rows) * min_rows
        pad = rows * lanes - total
        xf = jnp.pad(x.reshape(-1), (0, pad)).reshape(rows, lanes)
    else:
        rows = total // lanes
        pad = 0
        xf = x.reshape(rows, lanes)

    # ---- block / grid selection --------------------------------------------
    max_block_bytes = 4 * 1024 * 1024            # per block; x+out+coeff dbuf <= 24 MiB
    row_bytes = lanes * itemsize
    max_block_rows = max(min_rows, max_block_bytes // row_bytes)

    # The drop pattern repeats every `period` rows; a block that is a multiple
    # of it sees the identical coeff tile at every grid step (VMEM-resident).
    period = n // math.gcd(n, lanes)
    step_resident = (period * min_rows) // math.gcd(period, min_rows)  # lcm

    block_rows = _pick_block_rows(rows, step_resident, max_block_rows)
    resident = block_rows is not None
    if not resident:
        block_rows = _pick_block_rows(rows, min_rows, max_block_rows)
    if block_rows is None:                       # unreachable by construction
        block_rows = rows
        resident = False

    grid = (rows // block_rows,)

    if resident:
        coeff = _build_coeff(block_rows, lanes, n, neurons, factor, x.dtype)
        coeff_spec = pl.BlockSpec((block_rows, lanes), lambda i: (0, 0))
    else:
        coeff = _build_coeff(rows, lanes, n, neurons, factor, x.dtype)
        coeff_spec = pl.BlockSpec((block_rows, lanes), lambda i: (i, 0))

    out_flat = pl.pallas_call(
        _sn_dropout_kernel,
        out_shape=jax.ShapeDtypeStruct((rows, lanes), x.dtype),
        grid_spec=pltpu.PrefetchScalarGridSpec(
            num_scalar_prefetch=0,
            grid=grid,
            in_specs=[pl.BlockSpec((block_rows, lanes), lambda i: (i, 0)),
                      coeff_spec],
            out_specs=pl.BlockSpec((block_rows, lanes), lambda i: (i, 0)),
        ),
        compiler_params=pltpu.CompilerParams(
            dimension_semantics=("parallel",),
            vmem_limit_bytes=48 * 1024 * 1024,
        ),
    )(xf, coeff)

    if pad:
        return out_flat.reshape(-1)[:total].reshape(shape)
    return out_flat.reshape(shape)


def _reference(x, neurons):
    shape = x.shape
    b = shape[0]
    n = x.size // b
    xf = x.reshape(b, n)
    coeff = jnp.ones_like(xf)
    if len(neurons) > 0:
        idx = jnp.asarray(list(neurons), dtype=jnp.int32)
        coeff = coeff.at[:, idx].set(0.0)
    p = float(len(neurons)) / float(n)
    factor = 1.0 / (1.0 - p)
    return (factor * coeff * xf).reshape(shape)


if __name__ == "__main__":
    key = jax.random.PRNGKey(0)

    # 1) Canonical SegNet-style feature map (NCHW), a few dropped neurons.
    x = jax.random.normal(key, (2, 4, 16, 16), dtype=jnp.float32)
    neurons = [3, 17, 100, 777]
    out = jax.block_until_ready(single_neuron_dropout(x, neurons))
    ref = _reference(x, neurons)
    assert out.shape == x.shape and out.dtype == x.dtype
    assert jnp.allclose(out, ref, atol=1e-6, rtol=1e-6)

    # 2) No-dropout: bypasses the kernel entirely; exact identity.
    out0 = jax.block_until_ready(single_neuron_dropout(x, []))
    assert jnp.array_equal(out0, x)

    # 3) Larger map: grid > 1 with the VMEM-resident coeff tile.
    x2 = jax.random.normal(jax.random.PRNGKey(1), (2, 8, 64, 64),
                           dtype=jnp.float32)
    neurons2 = [0, 5000, 8191, 32767]
    out2 = jax.block_until_ready(single_neuron_dropout(x2, neurons2))
    ref2 = _reference(x2, neurons2)
    assert jnp.allclose(out2, ref2, atol=1e-6, rtol=1e-6)

    # 4) Irregular size: padding + streamed-coeff fallback path.
    x3 = jax.random.normal(jax.random.PRNGKey(2), (2, 3, 10, 10),
                           dtype=jnp.float32)
    neurons3 = [0, 7, 299]
    out3 = jax.block_until_ready(single_neuron_dropout(x3, neurons3))
    ref3 = _reference(x3, neurons3)
    assert jnp.allclose(out3, ref3, atol=1e-6, rtol=1e-6)

    print("KERNEL_OK")
</pallas_src>

<mosaic_0001>
module attributes {stable_mosaic.version = 11 : i64} {
  func.func @_sn_dropout_kernel(%arg0: i32, %arg1: memref<8x256xf32, #tpu.memory_space<vmem>>, %arg2: memref<8x256xf32, #tpu.memory_space<vmem>>, %arg3: memref<8x256xf32, #tpu.memory_space<vmem>>) attributes {dimension_semantics = [#tpu.dimension_semantics<parallel>], iteration_bounds = array<i64: 1>, scalar_prefetch = 0 : i64, scratch_operands = 0 : i64, tpu.core_type = #tpu.core_type<tc>, window_params = [{transform_indices = @transform_0, window_bounds = array<i64: 8, 256>}, {pipeline_mode = #tpu.pipeline_mode<synchronous>, transform_indices = @transform_1, window_bounds = array<i64: 8, 256>}, {transform_indices = @transform_2, window_bounds = array<i64: 8, 256>}]} {
    %c0 = arith.constant 0 : index
    %c0_0 = arith.constant 0 : index
    %0 = vector.load %arg1[%c0, %c0_0] : memref<8x256xf32, #tpu.memory_space<vmem>>, vector<8x256xf32>
    %c0_1 = arith.constant 0 : index
    %c0_2 = arith.constant 0 : index
    %1 = vector.load %arg2[%c0_1, %c0_2] : memref<8x256xf32, #tpu.memory_space<vmem>>, vector<8x256xf32>
    %2 = arith.mulf %0, %1 : vector<8x256xf32>
    %c0_3 = arith.constant 0 : index
    %c0_4 = arith.constant 0 : index
    %3 = vector.load %arg3[%c0_3, %c0_4] : memref<8x256xf32, #tpu.memory_space<vmem>>, vector<8x256xf32>
    tpu.vector_store %arg3[%c0_3, %c0_4], %2 {strides = array<i32>} : memref<8x256xf32, #tpu.memory_space<vmem>>, vector<8x256xf32>,
    return
  }
  func.func @transform_0(%arg0: i32) -> (i32, i32) {
    %c0_i32 = arith.constant 0 : i32
    %c0_i32_0 = arith.constant 0 : i32
    return %arg0, %c0_i32 : i32, i32
  }
  func.func @transform_1(%arg0: i32) -> (i32, i32) {
    %c0_i32 = arith.constant 0 : i32
    %c0_i32_0 = arith.constant 0 : i32
    %c0_i32_1 = arith.constant 0 : i32
    return %c0_i32, %c0_i32_0 : i32, i32
  }
  func.func @transform_2(%arg0: i32) -> (i32, i32) {
    %c0_i32 = arith.constant 0 : i32
    %c0_i32_0 = arith.constant 0 : i32
    return %arg0, %c0_i32 : i32, i32
  }
}

</mosaic_0001>

<llo_original>
// kernel: tpu_custom_call.1
$region0: #{tpu_custom_call.1}
  #allocation0 [shape = 'u32[]', space=smem, size = 0x4, offset = 0x4, fixed_abs, tag = 'smem constant byte address 0x4 - core index']
  #allocation1 [shape = 'u32[144,128]{1,0:T(1,128)}', space=vmem, size = 0x12000, scoped, tag = 'internal scratch']
  %s0 = inlined_call_operand.hbm [shape: f32[8,256], index: 0, kind: input, shape index: {}]
  %s1 = inlined_call_operand.hbm [shape: f32[8,256], index: 1, kind: input, shape index: {}]
  %s2 = inlined_call_operand.hbm [shape: f32[8,256], index: 2, kind: output, shape index: {}]
  %s3 = sld [smem:[#allocation0]]
  $region26: #{tpu_custom_call.1} parent=0
    _
  %s5 = ssub.s32 1, %s3
  %s6 = scalar_select 0, %s5, %s3
  $region1: #{tpu_custom_call.1} parent=0
    #allocation2 [shape = 'u8[8192]{0}', space=vmem, size = 0x2000, scoped, tag = 'input window, operand 0, single buffered']
    #allocation3 [shape = 's32[1]{0}', space=sflag, size = 0x4, scoped, tag = 'scoped memory for tpu_custom_call.1']
    #allocation4 [shape = 's32[1]{0}', space=sflag, size = 0x4, scoped, tag = 'scoped memory for tpu_custom_call.1']
    #allocation5 [shape = 'u8[8192]{0}', space=vmem, size = 0x2000, scoped, tag = 'input window, operand 1, single buffered']
    #allocation6 [shape = 's32[1]{0}', space=sflag, size = 0x4, scoped, tag = 'scoped memory for tpu_custom_call.1']
    #allocation7 [shape = 'u8[8192]{0}', space=vmem, size = 0x2000, scoped, tag = 'output window, operand 0, single buffered']
    %7 = vsyncpa [#allocation3], 0
    %8 = vsyncpa [#allocation6], 0
    %9 = vsyncpa [#allocation4], 0
    // Predicated region
    $region2: #{tpu_custom_call.1} parent=1 // pred_check
      _
    $region3: #{tpu_custom_call.1} parent=1 // pred_check_branch
      %11 = sbr.rel (0) target = $region5
    $region4: #{tpu_custom_call.1} parent=1 // pred_region
      %s13 = ssub.s32 256, 256
      %14 = vsyncadd [#allocation3], %s13
      %s16 = sshll.u32 [#allocation2], 4
      %s17 = int_to_ptr.vmem [resolvable:$true] %s16
      %19 = dma.hbm_to_vmem [thread:$0]  %s0, 256, %s17, [#allocation3]
    $region5: #{tpu_custom_call.1} parent=1 // pred_fallthru
      _
    // Predicated region
    $region6: #{tpu_custom_call.1} parent=1 // pred_check
      _
    $region7: #{tpu_custom_call.1} parent=1 // pred_check_branch
      %21 = sbr.rel (0) target = $region9
    $region8: #{tpu_custom_call.1} parent=1 // pred_region
      %s23 = ssub.s32 256, 256
      %24 = vsyncadd [#allocation6], %s23
      %s26 = sshll.u32 [#allocation5], 4
      %s27 = int_to_ptr.vmem [resolvable:$true] %s26
      %29 = dma.hbm_to_vmem [thread:$0]  %s1, 256, %s27, [#allocation6]
    $region9: #{tpu_custom_call.1} parent=1 // pred_fallthru
      _
    // Predicated region
    $region10: #{tpu_custom_call.1} parent=1 // pred_check
      _
    $region11: #{tpu_custom_call.1} parent=1 // pred_check_branch
      %31 = sbr.rel (0) target = $region13
    $region12: #{tpu_custom_call.1} parent=1 // pred_region
      %32 = dma.done [#allocation3], 256
    $region13: #{tpu_custom_call.1} parent=1 // pred_fallthru
      _
    // Predicated region
    $region14: #{tpu_custom_call.1} parent=1 // pred_check
      _
    $region15: #{tpu_custom_call.1} parent=1 // pred_check_branch
      %34 = sbr.rel (0) target = $region17
    $region16: #{tpu_custom_call.1} parent=1 // pred_region
      %35 = dma.done [#allocation6], 256
    $region17: #{tpu_custom_call.1} parent=1 // pred_fallthru
      _
    %v36 = vld [vmem:[#allocation2] sm:$0xff]
    %v37 = vld [vmem:[#allocation2 + $0x8] sm:$0xff]
    %v38 = vld [vmem:[#allocation5] sm:$0xff]
    %v39 = vld [vmem:[#allocation5 + $0x8] sm:$0xff]
    %v40 = vmul.f32 %v36, %v38
    %v41 = vmul.f32 %v37, %v39
    %42 = vst [vmem:[#allocation7] sm:$0xff] %v40
    %43 = vst [vmem:[#allocation7 + $0x8] sm:$0xff] %v41
    // Predicated region
    $region18: #{tpu_custom_call.1} parent=1 // pred_check
      _
    $region19: #{tpu_custom_call.1} parent=1 // pred_check_branch
      %45 = sbr.rel (0) target = $region21
    $region20: #{tpu_custom_call.1} parent=1 // pred_region
      %s47 = ssub.s32 256, 256
      %48 = vsyncadd [#allocation4], %s47
      %s50 = sshll.u32 [#allocation7], 4
      %s51 = int_to_ptr.vmem [resolvable:$true] %s50
      %53 = dma.vmem_to_hbm [thread:$0]  %s51, 256, %s2, [#allocation4]
    $region21: #{tpu_custom_call.1} parent=1 // pred_fallthru
      _
    // Predicated region
    $region22: #{tpu_custom_call.1} parent=1 // pred_check
      _
    $region23: #{tpu_custom_call.1} parent=1 // pred_check_branch
      %55 = sbr.rel (0) target = $region25
    $region24: #{tpu_custom_call.1} parent=1 // pred_region
      %56 = dma.done [#allocation4], 256
    $region25: #{tpu_custom_call.1} parent=1 // pred_fallthru
      _
    %57 = vsyncpa [#allocation3], 1
    %58 = vsyncpa [#allocation6], 1
    %59 = vsyncpa [#allocation4], 1

</llo_original>
